<compile_context>
chip_gen: v7x
topology: tpu7x:2x2x1
jax: 0.10.0
libtpu: 0.0.40
codegen_flags: <defaults>
</compile_context>

<pallas_src>
import jax
import jax.numpy as jnp
from jax import lax
from jax.experimental import pallas as pl
from jax.experimental.pallas import tpu as pltpu


def _proj_kernel(k_ref, x_ref, o_ref):
    # k_ref: (Ho*Wo, H*W) composite pooling operator (resident, fetched once)
    # x_ref: (H*W, TB)    matricized input planes, batch in the lane dim
    # o_ref: (Ho*Wo, TB)  pooled output, batch in the lane dim
    o_ref[...] = jnp.dot(
        k_ref[...], x_ref[...], preferred_element_type=jnp.float32
    ).astype(o_ref.dtype)


def _pool_matrix(n_in):
    """Row/col pooling matrix for one AvgPool2d(3, stride=2, padding=1) stage.

    P[o, r] = 1 iff |r - 2*o| <= 1 (zero padding contributes nothing; divisor
    is always 9 = count_include_pad=True), shape (n_out, n_in)."""
    n_out = (n_in + 2 - 3) // 2 + 1
    o = jnp.arange(n_out, dtype=jnp.int32)[:, None]
    r = jnp.arange(n_in, dtype=jnp.int32)[None, :]
    return (jnp.abs(r - 2 * o) <= 1).astype(jnp.float32)


def _composite_pool_matrix(n, sampling_times):
    """Compose `sampling_times` pooling stages along one axis: (n_final, n)."""
    m = jnp.eye(n, dtype=jnp.float32)
    size = n
    for _ in range(sampling_times):
        p = _pool_matrix(size)
        m = p @ m
        size = p.shape[0]
    return m


def input_projection(x, sampling_times):
    """Equivalent of InputProjection.forward. x: (N, C, H, W) NCHW."""
    N, C, H, W = x.shape
    B = N * C

    # Host-side (hoisted) composite pooling operator, scale folded in once.
    ph_tot = _composite_pool_matrix(H, sampling_times)          # (Ho, H)
    pw_tot = _composite_pool_matrix(W, sampling_times)          # (Wo, W)
    Ho, Wo = ph_tot.shape[0], pw_tot.shape[0]
    scale = (1.0 / 9.0) ** sampling_times
    k_mat = jnp.kron(ph_tot, pw_tot) * scale                    # (Ho*Wo, H*W)
    if x.dtype == jnp.bfloat16:
        # Feed the MXU bf16 directly (f32 accumulation via preferred_element_type);
        # halves DMA bytes for this bandwidth-bound op on v6e/v7x.
        k_mat = k_mat.astype(jnp.bfloat16)

    # Lane-dense matricization: batch (N*C) is the last (128-lane) dim.
    x_mat = x.reshape(B, H * W).T                               # (H*W, B)

    # Batch tile: largest 128-multiple that divides B, else one full block.
    # (Blocks must have a lane dim that is a multiple of 128 or the full dim.)
    # For real workloads (B >= 256) this yields >= 2 parallel blocks so both
    # v7x TensorCores get work; keep each block well under the 32 MiB scoped
    # VMEM default (v7x has 64 MiB physical).
    tb = B
    for cand in (512, 256, 128):
        if B % cand == 0:
            tb = cand
            break
    grid = (B // tb,)

    flops = 2 * (Ho * Wo) * (H * W) * B
    bytes_accessed = (
        x_mat.size * x_mat.dtype.itemsize
        + k_mat.size * k_mat.dtype.itemsize
        + (Ho * Wo) * B * x.dtype.itemsize
    )

    out_mat = pl.pallas_call(
        _proj_kernel,
        out_shape=jax.ShapeDtypeStruct((Ho * Wo, B), x.dtype),
        grid=grid,
        in_specs=[
            # Composite operator: constant block index -> DMA'd once, stays resident.
            pl.BlockSpec((Ho * Wo, H * W), lambda b: (0, 0)),
            pl.BlockSpec((H * W, tb), lambda b: (0, b)),
        ],
        out_specs=pl.BlockSpec((Ho * Wo, tb), lambda b: (0, b)),
        compiler_params=pltpu.CompilerParams(
            dimension_semantics=("parallel",),
        ),
        cost_estimate=pl.CostEstimate(
            flops=int(flops), transcendentals=0, bytes_accessed=int(bytes_accessed)
        ),
    )(k_mat, x_mat)

    return out_mat.T.reshape(N, C, Ho, Wo)


def _reference(x, sampling_times):
    """Pure-JAX reference using reduce_window (matches PyTorch AvgPool2d semantics)."""
    y = x
    for _ in range(sampling_times):
        s = lax.reduce_window(
            y, 0.0, lax.add,
            window_dimensions=(1, 1, 3, 3),
            window_strides=(1, 1, 2, 2),
            padding=((0, 0), (0, 0), (1, 1), (1, 1)),
        )
        y = s / 9.0
    return y


if __name__ == "__main__":
    key = jax.random.PRNGKey(0)
    # samplingTimes=3 (module has no weights; __init__ only chooses # of pool stages)
    sampling_times = 3
    x = jax.random.normal(key, (2, 4, 16, 16), dtype=jnp.float32)

    out = jax.block_until_ready(input_projection(x, sampling_times))

    ref = _reference(x, sampling_times)
    assert out.shape == ref.shape == (2, 4, 2, 2), (out.shape, ref.shape)
    assert jnp.allclose(out, ref, atol=1e-5, rtol=1e-5), float(
        jnp.max(jnp.abs(out - ref))
    )

    print("KERNEL_OK")
</pallas_src>

<mosaic_0001>
module attributes {stable_mosaic.version = 11 : i64} {
  func.func @_proj_kernel(%arg0: i32, %arg1: memref<4x256xf32, #tpu.memory_space<vmem>>, %arg2: memref<256x8xf32, #tpu.memory_space<vmem>>, %arg3: memref<4x8xf32, #tpu.memory_space<vmem>>) attributes {dimension_semantics = [#tpu.dimension_semantics<parallel>], iteration_bounds = array<i64: 1>, scalar_prefetch = 0 : i64, scratch_operands = 0 : i64, tpu.core_type = #tpu.core_type<tc>, window_params = [{pipeline_mode = #tpu.pipeline_mode<synchronous>, transform_indices = @transform_0, window_bounds = array<i64: 4, 256>}, {transform_indices = @transform_1, window_bounds = array<i64: 256, 8>}, {transform_indices = @transform_2, window_bounds = array<i64: 4, 8>}]} {
    %c0 = arith.constant 0 : index
    %c0_0 = arith.constant 0 : index
    %0 = vector.load %arg1[%c0, %c0_0] : memref<4x256xf32, #tpu.memory_space<vmem>>, vector<4x256xf32>
    %c0_1 = arith.constant 0 : index
    %c0_2 = arith.constant 0 : index
    %1 = vector.load %arg2[%c0_1, %c0_2] : memref<256x8xf32, #tpu.memory_space<vmem>>, vector<256x8xf32>
    %cst = arith.constant dense<0.000000e+00> : vector<4x8xf32>
    %2 = tpu.matmul %0, %1, %cst {dimension_numbers = #tpu.dot_dimension_numbers<[1], [0], [0], [1], [0, 0, 1, 1], [], []>} : vector<4x256xf32>, vector<256x8xf32>, vector<4x8xf32> -> vector<4x8xf32>
    %c0_3 = arith.constant 0 : index
    %c0_4 = arith.constant 0 : index
    %3 = vector.load %arg3[%c0_3, %c0_4] : memref<4x8xf32, #tpu.memory_space<vmem>>, vector<4x8xf32>
    tpu.vector_store %arg3[%c0_3, %c0_4], %2 {strides = array<i32>} : memref<4x8xf32, #tpu.memory_space<vmem>>, vector<4x8xf32>,
    return
  }
  func.func @transform_0(%arg0: i32) -> (i32, i32) {
    %c0_i32 = arith.constant 0 : i32
    %c0_i32_0 = arith.constant 0 : i32
    %c0_i32_1 = arith.constant 0 : i32
    return %c0_i32, %c0_i32_0 : i32, i32
  }
  func.func @transform_1(%arg0: i32) -> (i32, i32) {
    %c0_i32 = arith.constant 0 : i32
    %c0_i32_0 = arith.constant 0 : i32
    return %c0_i32, %arg0 : i32, i32
  }
  func.func @transform_2(%arg0: i32) -> (i32, i32) {
    %c0_i32 = arith.constant 0 : i32
    %c0_i32_0 = arith.constant 0 : i32
    return %c0_i32, %arg0 : i32, i32
  }
}

</mosaic_0001>

<llo_original>
// kernel: tpu_custom_call.1
$region0: #{tpu_custom_call.1}
  #allocation0 [shape = 'u32[]', space=smem, size = 0x4, offset = 0x4, fixed_abs, tag = 'smem constant byte address 0x4 - core index']
  #allocation1 [shape = 'u32[144,128]{1,0:T(1,128)}', space=vmem, size = 0x12000, scoped, tag = 'internal scratch']
  %s0 = inlined_call_operand.vmem [shape: f32[4,256], index: 0, kind: input, shape index: {}]
  %s1 = inlined_call_operand.vmem [shape: f32[256,8], index: 1, kind: input, shape index: {}]
  %s2 = inlined_call_operand.hbm [shape: f32[4,8], index: 2, kind: output, shape index: {}]
  %s3 = sld [smem:[#allocation0]]
  $region18: #{tpu_custom_call.1} parent=0
    _
  %s5 = ssub.s32 1, %s3
  %s6 = scalar_select 0, %s5, %s3
  $region1: #{tpu_custom_call.1} parent=0
    #allocation2 [shape = 'u8[2048]{0}', space=vmem, size = 0x800, scoped, tag = 'output window, operand 0, single buffered']
    #allocation3 [shape = 's32[1]{0}', space=sflag, size = 0x4, scoped, tag = 'scoped memory for tpu_custom_call.1']
    %7 = vsyncpa [#allocation3], 0
    // Predicated region
    $region2: #{tpu_custom_call.1} parent=1 // pred_check
      _
    $region3: #{tpu_custom_call.1} parent=1 // pred_check_branch
      %9 = sbr.rel (0) target = $region5
    $region4: #{tpu_custom_call.1} parent=1 // pred_region
      _
    $region5: #{tpu_custom_call.1} parent=1 // pred_fallthru
      _
    // Predicated region
    $region6: #{tpu_custom_call.1} parent=1 // pred_check
      _
    $region7: #{tpu_custom_call.1} parent=1 // pred_check_branch
      %11 = sbr.rel (0) target = $region9
    $region8: #{tpu_custom_call.1} parent=1 // pred_region
      _
    $region9: #{tpu_custom_call.1} parent=1 // pred_fallthru
      _
    %v12 = vld [vmem:[%s0] sm:$0xff]
    %v13 = vld [vmem:[%s1] sm:$0xff]
    %v14 = vld [vmem:[%s1 + $0x8] sm:$0xff]
    %v15 = vld [vmem:[%s1 + $0x10] sm:$0xff]
    %v16 = vld [vmem:[%s1 + $0x18] sm:$0xff]
    %v17 = vld [vmem:[%s1 + $0x20] sm:$0xff]
    %v18 = vld [vmem:[%s1 + $0x28] sm:$0xff]
    %v19 = vld [vmem:[%s1 + $0x30] sm:$0xff]
    %v20 = vld [vmem:[%s1 + $0x38] sm:$0xff]
    %v21 = vld [vmem:[%s1 + $0x40] sm:$0xff]
    %v22 = vld [vmem:[%s1 + $0x48] sm:$0xff]
    %v23 = vld [vmem:[%s1 + $0x50] sm:$0xff]
    %v24 = vld [vmem:[%s1 + $0x58] sm:$0xff]
    %v25 = vld [vmem:[%s1 + $0x60] sm:$0xff]
    %v26 = vld [vmem:[%s1 + $0x68] sm:$0xff]
    %v27 = vld [vmem:[%s1 + $0x70] sm:$0xff]
    %v28 = vld [vmem:[%s1 + $0x78] sm:$0xff]
    %v29 = vld [vmem:[%s1 + $0x80] sm:$0xff]
    %v30 = vld [vmem:[%s1 + $0x88] sm:$0xff]
    %v31 = vld [vmem:[%s1 + $0x90] sm:$0xff]
    %v32 = vld [vmem:[%s1 + $0x98] sm:$0xff]
    %v33 = vld [vmem:[%s1 + $0xa0] sm:$0xff]
    %v34 = vld [vmem:[%s1 + $0xa8] sm:$0xff]
    %v35 = vld [vmem:[%s1 + $0xb0] sm:$0xff]
    %v36 = vld [vmem:[%s1 + $0xb8] sm:$0xff]
    %v37 = vld [vmem:[%s1 + $0xc0] sm:$0xff]
    %v38 = vld [vmem:[%s1 + $0xc8] sm:$0xff]
    %v39 = vld [vmem:[%s1 + $0xd0] sm:$0xff]
    %v40 = vld [vmem:[%s1 + $0xd8] sm:$0xff]
    %v41 = vld [vmem:[%s1 + $0xe0] sm:$0xff]
    %v42 = vld [vmem:[%s1 + $0xe8] sm:$0xff]
    %v43 = vld [vmem:[%s1 + $0xf0] sm:$0xff]
    %v44 = vld [vmem:[%s1 + $0xf8] sm:$0xff]
    %v46 = vcombine.high %v12, %v12
    %48 = vmatprep.subr.mxu0 0.0
    %49 = vmatpush1.msra.mxu0 %v13
    %50 = vmatprep.subr.mxu0 0.0
    %51 = vmatpush1.msra.mxu0 %v14
    %52 = vmatprep.subr.mxu0 0.0
    %53 = vmatpush1.msra.mxu0 %v15
    %54 = vmatprep.subr.mxu0 0.0
    %55 = vmatpush1.msra.mxu0 %v16
    %56 = vmatprep.subr.mxu0 0.0
    %57 = vmatpush1.msra.mxu0 %v17
    %58 = vmatprep.subr.mxu0 0.0
    %59 = vmatpush1.msra.mxu0 %v18
    %60 = vmatprep.subr.mxu0 0.0
    %61 = vmatpush1.msra.mxu0 %v19
    %62 = vmatprep.subr.mxu0 0.0
    %63 = vmatpush1.msra.mxu0 %v20
    %64 = vmatprep.subr.mxu0 0.0
    %65 = vmatpush1.msra.mxu0 %v21
    %66 = vmatprep.subr.mxu0 0.0
    %67 = vmatpush1.msra.mxu0 %v22
    %68 = vmatprep.subr.mxu0 0.0
    %69 = vmatpush1.msra.mxu0 %v23
    %70 = vmatprep.subr.mxu0 0.0
    %71 = vmatpush1.msra.mxu0 %v24
    %72 = vmatprep.subr.mxu0 0.0
    %73 = vmatpush1.msra.mxu0 %v25
    %74 = vmatprep.subr.mxu0 0.0
    %75 = vmatpush1.msra.mxu0 %v26
    %76 = vmatprep.subr.mxu0 0.0
    %77 = vmatpush1.msra.mxu0 %v27
    %78 = vmatprep.subr.mxu0 0.0
    %79 = vmatpush1.msra.mxu0 %v28
    %80 = vmatprep.subr.mxu0 0.0
    %81 = vmatpush1.msra.mxu0 %v29
    %82 = vmatprep.subr.mxu0 0.0
    %83 = vmatpush1.msra.mxu0 %v30
    %84 = vmatprep.subr.mxu0 0.0
    %85 = vmatpush1.msra.mxu0 %v31
    %86 = vmatprep.subr.mxu0 0.0
    %87 = vmatpush1.msra.mxu0 %v32
    %88 = vmatprep.subr.mxu0 0.0
    %89 = vmatpush1.msra.mxu0 %v33
    %90 = vmatprep.subr.mxu0 0.0
    %91 = vmatpush1.msra.mxu0 %v34
    %92 = vmatprep.subr.mxu0 0.0
    %93 = vmatpush1.msra.mxu0 %v35
    %94 = vmatprep.subr.mxu0 0.0
    %95 = vmatpush1.msra.mxu0 %v36
    %96 = vmatprep.subr.mxu0 0.0
    %97 = vmatpush1.msra.mxu0 %v37
    %98 = vmatprep.subr.mxu0 0.0
    %99 = vmatpush1.msra.mxu0 %v38
    %100 = vmatprep.subr.mxu0 0.0
    %101 = vmatpush1.msra.mxu0 %v39
    %102 = vmatprep.subr.mxu0 0.0
    %103 = vmatpush1.msra.mxu0 %v40
    %104 = vmatprep.subr.mxu0 0.0
    %105 = vmatpush1.msra.mxu0 %v41
    %106 = vmatprep.subr.mxu0 0.0
    %107 = vmatpush1.msra.mxu0 %v42
    %108 = vmatprep.subr.mxu0 0.0
    %109 = vmatpush1.msra.mxu0 %v43
    %110 = vmatprep.subr.mxu0 0.0
    %111 = vmatpush1.msra.mxu0 %v44
    %112 = vmatprep.mubr.f32.mxu0 %v46
    %113 = vmatmul.mubr.f32.gmra.mrb[0].mxu0 %v12
    %v114 = vpop.f32.mrb[0].mxu0
    %v115 = vadd.f32 0.0, %v114
    %v116 = vpop.f32.mrb[0].mxu0
    %117 = vdwg.mxu0
    %vm118 = vcmask 60416
    %119 = vst.msk [vmem:[#allocation2] sm:$0xf] %vm118, %v115
    // Predicated region
    $region10: #{tpu_custom_call.1} parent=1 // pred_check
      _
    $region11: #{tpu_custom_call.1} parent=1 // pred_check_branch
      %121 = sbr.rel (0) target = $region13
    $region12: #{tpu_custom_call.1} parent=1 // pred_region
      %s123 = ssub.s32 64, 64
      %124 = vsyncadd [#allocation3], %s123
      %s126 = sshll.u32 [#allocation2], 4
      %s127 = int_to_ptr.vmem [resolvable:$true] %s126
      %129 = dma.vmem_to_hbm [thread:$0]  %s127, 64, %s2, [#allocation3]
    $region13: #{tpu_custom_call.1} parent=1 // pred_fallthru
      _
    // Predicated region
    $region14: #{tpu_custom_call.1} parent=1 // pred_check
      _
    $region15: #{tpu_custom_call.1} parent=1 // pred_check_branch
      %131 = sbr.rel (0) target = $region17
    $region16: #{tpu_custom_call.1} parent=1 // pred_region
      %132 = dma.done [#allocation3], 64
    $region17: #{tpu_custom_call.1} parent=1 // pred_fallthru
      _
    %133 = vsyncpa [#allocation3], 1

</llo_original>
